<compile_context>
chip_gen: v5e
topology: v5e:2x2
jax: 0.10.0
libtpu: 0.0.40
codegen_flags: <defaults>
</compile_context>

<pallas_src>
import functools

import jax
import jax.numpy as jnp
from jax.experimental import pallas as pl
from jax.experimental.pallas import tpu as pltpu

EPS = 1e-5  # PyTorch BatchNorm1d default eps


def _round_up(n, m):
    return ((n + m - 1) // m) * m


def _cdiv(a, b):
    return -(-a // b)


def _vmem_capacity_bytes():
    """Per-core VMEM capacity; conservative 64 MiB (v7x) fallback."""
    try:
        info = pltpu.get_tpu_info()
        cap = int(getattr(info, "vmem_capacity_bytes", 0))
        if cap > 0:
            return cap
    except Exception:
        pass
    return 64 * 2**20


def residual_block_kernel(x_ref, w1_ref, b1_ref, w2_ref, b2_ref, o_ref):
    """One (TB, Hp) batch tile of relu(bn2(fc2(relu(bn1(fc1(x))))) + x).

    BN is pre-folded into (w, b). x arrives in f32 (exact residual path);
    matmul operands are cast to the weight dtype (bf16 fast path) with f32
    accumulation; bias / ReLU / residual math stays f32 (v5e-friendly).
    """
    # fc1 (+ folded bn1) -> relu
    h = jnp.dot(x_ref[...].astype(w1_ref.dtype), w1_ref[...],
                preferred_element_type=jnp.float32) + b1_ref[...]
    h = jnp.maximum(h, 0.0)

    # dropout: identity in eval mode.
    # TODO(synk): training-mode dropout would need pltpu.prng_random_bits.

    # fc2 (+ folded bn2)
    h = jnp.dot(h.astype(w2_ref.dtype), w2_ref[...],
                preferred_element_type=jnp.float32) + b2_ref[...]

    # residual add + relu, f32; x re-read here (no long-lived f32 temporary)
    o_ref[...] = jnp.maximum(h + x_ref[...], 0.0).astype(o_ref.dtype)


def _fold_bn(w, b, gamma, beta, rmean, rvar):
    """Fold eval-mode BatchNorm1d into a Linear layer.

    Returns (wt, bf) with wt shaped (H_in, H_out) so that
    x @ wt + bf == bn(x @ w.T + b) using running statistics.
    """
    scale = gamma / jnp.sqrt(rvar + EPS)   # (H_out,)
    shift = beta - rmean * scale           # (H_out,)
    wt = w.T * scale[None, :]              # column scale on (H_in, H_out)
    bf = b * scale + shift
    return wt, bf


def _resident_spec(shape):
    """Constant-index (VMEM-resident) spec; single pipeline buffer if supported."""
    try:
        return pl.BlockSpec(shape, lambda i: (0, 0), pipeline_mode=pl.Buffered(1))
    except TypeError:  # older BlockSpec without pipeline_mode kwarg
        return pl.BlockSpec(shape, lambda i: (0, 0))


@functools.partial(jax.jit,
                   static_argnames=("block_b", "matmul_dtype", "out_dtype"))
def residual_block(x, params, *, block_b=512, matmul_dtype=jnp.bfloat16,
                   out_dtype=None):
    """x: (B, H) float32. params: dict of fc/bn parameters (see init_params)."""
    B, H = x.shape
    out_dtype = x.dtype if out_dtype is None else jnp.dtype(out_dtype)

    # One-time eval-mode transform: fold BN into the linear weights/biases.
    w1t, b1 = _fold_bn(params["w1"], params["b1"], params["g1"],
                       params["be1"], params["rm1"], params["rv1"])
    w2t, b2 = _fold_bn(params["w2"], params["b2"], params["g2"],
                       params["be2"], params["rm2"], params["rv2"])

    # Lane dim padded to a multiple of 128 (unmasked stores, full-width MXU).
    Hp = _round_up(max(H, 128), 128)
    w_item = jnp.dtype(matmul_dtype).itemsize
    o_item = jnp.dtype(out_dtype).itemsize

    # ---- per-generation VMEM budget (per TensorCore) ----
    vmem_cap = _vmem_capacity_bytes()
    budget = int(0.80 * vmem_cap)
    # resident weights (single-buffered via Buffered(1)) + biases
    fixed = 2 * Hp * Hp * w_item + 2 * Hp * 4
    # per batch-row bytes: x double-buffer (f32) + out double-buffer
    # + f32 intermediates (h, relu, add) + bf16 casts of x/h
    per_row = Hp * (2 * 4 + 2 * o_item + 3 * 4 + 2 * w_item)
    if budget > fixed:
        tb_vmem_cap = max(8, ((budget - fixed) // per_row) // 8 * 8)
    else:
        tb_vmem_cap = 8
    # TODO(synk): if the folded weights alone exceed the per-core VMEM budget
    # (very large hidden_dim on v7x), a weight-tiled fallback with an extra
    # "arbitrary" grid axis and an f32 VMEM accumulator would be needed.

    # ---- batch tiling: balanced tiles, >=2 tiles when there is enough work
    # so both v7x TensorCores get a share; padding waste <= one sublane group.
    tb_cap = max(8, min(block_b, tb_vmem_cap))
    n_tiles = max(1, _cdiv(_round_up(B, 8), tb_cap))
    if n_tiles == 1 and B >= 16:
        n_tiles = 2
    TB = _round_up(_cdiv(B, n_tiles), 8)
    n_tiles = _cdiv(B, TB)
    Bp = n_tiles * TB

    def pad2(a, rows, cols):
        return jnp.pad(a, ((0, rows - a.shape[0]), (0, cols - a.shape[1])))

    xp = pad2(x.astype(jnp.float32), Bp, Hp)            # f32 residual path
    w1p = pad2(w1t, Hp, Hp).astype(matmul_dtype)
    w2p = pad2(w2t, Hp, Hp).astype(matmul_dtype)
    b1p = jnp.pad(b1, (0, Hp - H)).reshape(1, Hp).astype(jnp.float32)
    b2p = jnp.pad(b2, (0, Hp - H)).reshape(1, Hp).astype(jnp.float32)

    vmem_need = fixed + TB * per_row
    vmem_limit = int(min(vmem_cap, max(int(1.25 * vmem_need), 16 * 2**20)))

    cost = pl.CostEstimate(
        flops=4 * Bp * Hp * Hp,                     # two (TB,Hp)x(Hp,Hp) matmuls/tile
        transcendentals=0,
        bytes_accessed=(Bp * Hp * 4                 # x (f32)
                        + Bp * Hp * o_item          # out
                        + 2 * Hp * Hp * w_item      # weights
                        + 2 * Hp * 4),              # biases
    )

    grid = (Bp // TB,)
    out = pl.pallas_call(
        residual_block_kernel,
        out_shape=jax.ShapeDtypeStruct((Bp, Hp), out_dtype),
        grid=grid,
        in_specs=[
            pl.BlockSpec((TB, Hp), lambda i: (i, 0)),   # x: batch-tiled, f32
            _resident_spec((Hp, Hp)),                   # w1: VMEM-resident, 1 buffer
            _resident_spec((1, Hp)),                    # b1
            _resident_spec((Hp, Hp)),                   # w2: VMEM-resident, 1 buffer
            _resident_spec((1, Hp)),                    # b2
        ],
        out_specs=pl.BlockSpec((TB, Hp), lambda i: (i, 0)),
        compiler_params=pltpu.CompilerParams(
            dimension_semantics=("parallel",),          # batch tiles across cores
            vmem_limit_bytes=vmem_limit,
        ),
        cost_estimate=cost,
    )(xp, w1p, b1p, w2p, b2p)

    return out[:B, :H]


def init_params(key, hidden_dim):
    """Deterministic synthetic initialization matching the PyTorch module's shapes."""
    ks = jax.random.split(key, 10)
    H = hidden_dim
    bound = 1.0 / jnp.sqrt(H)
    return {
        # fc1: nn.Linear(H, H) -> weight (H, H), bias (H,)
        "w1": jax.random.uniform(ks[0], (H, H), jnp.float32, -bound, bound),
        "b1": jax.random.uniform(ks[1], (H,), jnp.float32, -bound, bound),
        # bn1: nn.BatchNorm1d(H) -> gamma, beta, running_mean, running_var
        "g1": 1.0 + 0.1 * jax.random.normal(ks[2], (H,), jnp.float32),
        "be1": 0.1 * jax.random.normal(ks[3], (H,), jnp.float32),
        "rm1": 0.1 * jax.random.normal(ks[4], (H,), jnp.float32),
        "rv1": 1.0 + 0.1 * jax.random.uniform(ks[5], (H,), jnp.float32),
        # fc2
        "w2": jax.random.uniform(ks[6], (H, H), jnp.float32, -bound, bound),
        "b2": jax.random.uniform(ks[7], (H,), jnp.float32, -bound, bound),
        # bn2
        "g2": 1.0 + 0.1 * jax.random.normal(ks[8], (H,), jnp.float32),
        "be2": 0.1 * jax.random.normal(ks[9], (H,), jnp.float32),
        "rm2": jnp.zeros((H,), jnp.float32),
        "rv2": jnp.ones((H,), jnp.float32),
    }


def reference(x, p):
    """Pure-JAX reference of the PyTorch forward (eval mode)."""
    h = x @ p["w1"].T + p["b1"]
    h = (h - p["rm1"]) / jnp.sqrt(p["rv1"] + EPS) * p["g1"] + p["be1"]
    h = jnp.maximum(h, 0.0)
    h = h @ p["w2"].T + p["b2"]
    h = (h - p["rm2"]) / jnp.sqrt(p["rv2"] + EPS) * p["g2"] + p["be2"]
    return jnp.maximum(h + x, 0.0)


if __name__ == "__main__":
    key = jax.random.PRNGKey(0)
    k_x, k_p = jax.random.split(key)

    B, H = 8, 32  # small shapes consistent with the module (batch, hidden_dim)
    x = jax.random.normal(k_x, (B, H), jnp.float32)
    params = init_params(k_p, H)

    ref = reference(x, params)

    # Default: bf16 matmul operands (v6e/v7x MXU fast path), f32 accumulation,
    # f32 residual/bias/ReLU (residual stays exact: x is f32 all the way).
    out_bf16 = jax.block_until_ready(residual_block(x, params))
    assert out_bf16.shape == (B, H)
    assert jnp.allclose(out_bf16, ref, atol=8e-2, rtol=5e-2), "bf16 mismatch vs reference"

    # f32 operand path for tight-accuracy use.
    out_f32 = jax.block_until_ready(
        residual_block(x, params, matmul_dtype=jnp.float32))
    assert out_f32.shape == (B, H)
    assert jnp.allclose(out_f32, ref, atol=5e-3, rtol=5e-3), "f32 mismatch vs reference"

    print("KERNEL_OK")
</pallas_src>

<mosaic_0001>
module attributes {stable_mosaic.version = 11 : i64} {
  func.func @residual_block_kernel(%arg0: i32, %arg1: memref<8x128xf32, #tpu.memory_space<vmem>>, %arg2: memref<128x128xbf16, #tpu.memory_space<vmem>>, %arg3: memref<1x128xf32, #tpu.memory_space<vmem>>, %arg4: memref<128x128xbf16, #tpu.memory_space<vmem>>, %arg5: memref<1x128xf32, #tpu.memory_space<vmem>>, %arg6: memref<8x128xf32, #tpu.memory_space<vmem>>) attributes {dimension_semantics = [#tpu.dimension_semantics<parallel>], iteration_bounds = array<i64: 1>, scalar_prefetch = 0 : i64, scratch_operands = 0 : i64, tpu.core_type = #tpu.core_type<tc>, window_params = [{transform_indices = @transform_0, window_bounds = array<i64: 8, 128>}, {pipeline_mode = #tpu.pipeline_mode<synchronous>, transform_indices = @transform_1, window_bounds = array<i64: 128, 128>}, {pipeline_mode = #tpu.pipeline_mode<synchronous>, transform_indices = @transform_2, window_bounds = array<i64: 1, 128>}, {pipeline_mode = #tpu.pipeline_mode<synchronous>, transform_indices = @transform_3, window_bounds = array<i64: 128, 128>}, {pipeline_mode = #tpu.pipeline_mode<synchronous>, transform_indices = @transform_4, window_bounds = array<i64: 1, 128>}, {transform_indices = @transform_5, window_bounds = array<i64: 8, 128>}]} {
    %c0 = arith.constant 0 : index
    %c0_0 = arith.constant 0 : index
    %0 = vector.load %arg1[%c0, %c0_0] : memref<8x128xf32, #tpu.memory_space<vmem>>, vector<8x128xf32>
    %1 = arith.truncf %0 : vector<8x128xf32> to vector<8x128xbf16>
    %c0_1 = arith.constant 0 : index
    %c0_2 = arith.constant 0 : index
    %2 = vector.load %arg2[%c0_1, %c0_2] : memref<128x128xbf16, #tpu.memory_space<vmem>>, vector<128x128xbf16>
    %cst = arith.constant dense<0.000000e+00> : vector<8x128xf32>
    %3 = tpu.matmul %1, %2, %cst {dimension_numbers = #tpu.dot_dimension_numbers<[1], [0], [0], [1], [0, 0, 1, 1], [], []>} : vector<8x128xbf16>, vector<128x128xbf16>, vector<8x128xf32> -> vector<8x128xf32>
    %c0_3 = arith.constant 0 : index
    %c0_4 = arith.constant 0 : index
    %4 = vector.load %arg3[%c0_3, %c0_4] : memref<1x128xf32, #tpu.memory_space<vmem>>, vector<1x128xf32>
    %5 = vector.broadcast %4 : vector<1x128xf32> to vector<8x128xf32>
    %6 = arith.addf %3, %5 : vector<8x128xf32>
    %cst_5 = arith.constant 0.000000e+00 : f32
    %7 = vector.broadcast %cst_5 : f32 to vector<8x128xf32>
    %8 = arith.maximumf %6, %7 : vector<8x128xf32>
    %9 = arith.truncf %8 : vector<8x128xf32> to vector<8x128xbf16>
    %c0_6 = arith.constant 0 : index
    %c0_7 = arith.constant 0 : index
    %10 = vector.load %arg4[%c0_6, %c0_7] : memref<128x128xbf16, #tpu.memory_space<vmem>>, vector<128x128xbf16>
    %cst_8 = arith.constant dense<0.000000e+00> : vector<8x128xf32>
    %11 = tpu.matmul %9, %10, %cst_8 {dimension_numbers = #tpu.dot_dimension_numbers<[1], [0], [0], [1], [0, 0, 1, 1], [], []>} : vector<8x128xbf16>, vector<128x128xbf16>, vector<8x128xf32> -> vector<8x128xf32>
    %c0_9 = arith.constant 0 : index
    %c0_10 = arith.constant 0 : index
    %12 = vector.load %arg5[%c0_9, %c0_10] : memref<1x128xf32, #tpu.memory_space<vmem>>, vector<1x128xf32>
    %13 = vector.broadcast %12 : vector<1x128xf32> to vector<8x128xf32>
    %14 = arith.addf %11, %13 : vector<8x128xf32>
    %c0_11 = arith.constant 0 : index
    %c0_12 = arith.constant 0 : index
    %15 = vector.load %arg1[%c0_11, %c0_12] : memref<8x128xf32, #tpu.memory_space<vmem>>, vector<8x128xf32>
    %16 = arith.addf %14, %15 : vector<8x128xf32>
    %cst_13 = arith.constant 0.000000e+00 : f32
    %17 = vector.broadcast %cst_13 : f32 to vector<8x128xf32>
    %18 = arith.maximumf %16, %17 : vector<8x128xf32>
    %c0_14 = arith.constant 0 : index
    %c0_15 = arith.constant 0 : index
    %19 = vector.load %arg6[%c0_14, %c0_15] : memref<8x128xf32, #tpu.memory_space<vmem>>, vector<8x128xf32>
    tpu.vector_store %arg6[%c0_14, %c0_15], %18 {strides = array<i32>} : memref<8x128xf32, #tpu.memory_space<vmem>>, vector<8x128xf32>,
    return
  }
  func.func @transform_0(%arg0: i32) -> (i32, i32) {
    %c0_i32 = arith.constant 0 : i32
    %c0_i32_0 = arith.constant 0 : i32
    return %arg0, %c0_i32 : i32, i32
  }
  func.func @transform_1(%arg0: i32) -> (i32, i32) {
    %c0_i32 = arith.constant 0 : i32
    %c0_i32_0 = arith.constant 0 : i32
    %c0_i32_1 = arith.constant 0 : i32
    return %c0_i32, %c0_i32_0 : i32, i32
  }
  func.func @transform_2(%arg0: i32) -> (i32, i32) {
    %c0_i32 = arith.constant 0 : i32
    %c0_i32_0 = arith.constant 0 : i32
    %c0_i32_1 = arith.constant 0 : i32
    return %c0_i32, %c0_i32_0 : i32, i32
  }
  func.func @transform_3(%arg0: i32) -> (i32, i32) {
    %c0_i32 = arith.constant 0 : i32
    %c0_i32_0 = arith.constant 0 : i32
    %c0_i32_1 = arith.constant 0 : i32
    return %c0_i32, %c0_i32_0 : i32, i32
  }
  func.func @transform_4(%arg0: i32) -> (i32, i32) {
    %c0_i32 = arith.constant 0 : i32
    %c0_i32_0 = arith.constant 0 : i32
    %c0_i32_1 = arith.constant 0 : i32
    return %c0_i32, %c0_i32_0 : i32, i32
  }
  func.func @transform_5(%arg0: i32) -> (i32, i32) {
    %c0_i32 = arith.constant 0 : i32
    %c0_i32_0 = arith.constant 0 : i32
    return %arg0, %c0_i32 : i32, i32
  }
}

</mosaic_0001>

<llo_original>
// kernel: residual_block.1
$region0: #{residual_block.1}
  #allocation0 [shape = 'u32[]', space=smem, size = 0x4, offset = 0x4, fixed_abs, tag = 'smem constant byte address 0x4 - core index']
  #allocation1 [shape = 'u32[72,128]{1,0:T(1,128)}', space=vmem, size = 0x9000, scoped, tag = 'internal scratch']
  %s0 = inlined_call_operand.vmem [shape: f32[8,128], index: 0, kind: input, shape index: {}]
  %s1 = inlined_call_operand.vmem [shape: bf16[128,128], index: 1, kind: input, shape index: {}]
  %s2 = inlined_call_operand.vmem [shape: f32[1,128], index: 2, kind: input, shape index: {}]
  %s3 = inlined_call_operand.vmem [shape: bf16[128,128], index: 3, kind: input, shape index: {}]
  %s4 = inlined_call_operand.vmem [shape: f32[1,128], index: 4, kind: input, shape index: {}]
  %s5 = inlined_call_operand.hbm [shape: f32[8,128], index: 5, kind: output, shape index: {}]
  %s6 = sld [smem:[#allocation0]]
  $region30: #{residual_block.1} parent=0
    _
  %s8 = ssub.s32 1, %s6
  %s9 = scalar_select 0, %s8, %s6
  $region1: #{residual_block.1} parent=0
    #allocation2 [shape = 'u8[4096]{0}', space=vmem, size = 0x1000, scoped, tag = 'output window, operand 0, single buffered']
    #allocation3 [shape = 's32[1]{0}', space=sflag, size = 0x4, scoped, tag = 'scoped memory for residual_block.1']
    %10 = vsyncpa [#allocation3], 0
    // Predicated region
    $region2: #{residual_block.1} parent=1 // pred_check
      _
    $region3: #{residual_block.1} parent=1 // pred_check_branch
      %12 = sbr.rel (0) target = $region5
    $region4: #{residual_block.1} parent=1 // pred_region
      _
    $region5: #{residual_block.1} parent=1 // pred_fallthru
      _
    // Predicated region
    $region6: #{residual_block.1} parent=1 // pred_check
      _
    $region7: #{residual_block.1} parent=1 // pred_check_branch
      %14 = sbr.rel (0) target = $region9
    $region8: #{residual_block.1} parent=1 // pred_region
      _
    $region9: #{residual_block.1} parent=1 // pred_fallthru
      _
    // Predicated region
    $region10: #{residual_block.1} parent=1 // pred_check
      _
    $region11: #{residual_block.1} parent=1 // pred_check_branch
      %16 = sbr.rel (0) target = $region13
    $region12: #{residual_block.1} parent=1 // pred_region
      _
    $region13: #{residual_block.1} parent=1 // pred_fallthru
      _
    // Predicated region
    $region14: #{residual_block.1} parent=1 // pred_check
      _
    $region15: #{residual_block.1} parent=1 // pred_check_branch
      %18 = sbr.rel (0) target = $region17
    $region16: #{residual_block.1} parent=1 // pred_region
      _
    $region17: #{residual_block.1} parent=1 // pred_fallthru
      _
    // Predicated region
    $region18: #{residual_block.1} parent=1 // pred_check
      _
    $region19: #{residual_block.1} parent=1 // pred_check_branch
      %20 = sbr.rel (0) target = $region21
    $region20: #{residual_block.1} parent=1 // pred_region
      _
    $region21: #{residual_block.1} parent=1 // pred_fallthru
      _
    %v21 = vld [vmem:[%s0] sm:$0xff]
    %v22 = vpack.c.bf16 %v21, %v21
    %v23 = vld [vmem:[%s1] sm:$0xf]
    %v24 = vld [vmem:[%s1 + $0x4] sm:$0xf]
    %v25 = vld [vmem:[%s1 + $0x8] sm:$0xf]
    %v26 = vld [vmem:[%s1 + $0xc] sm:$0xf]
    %v27 = vld [vmem:[%s1 + $0x10] sm:$0xf]
    %v28 = vld [vmem:[%s1 + $0x14] sm:$0xf]
    %v29 = vld [vmem:[%s1 + $0x18] sm:$0xf]
    %v30 = vld [vmem:[%s1 + $0x1c] sm:$0xf]
    %v31 = vld [vmem:[%s1 + $0x20] sm:$0xf]
    %v32 = vld [vmem:[%s1 + $0x24] sm:$0xf]
    %v33 = vld [vmem:[%s1 + $0x28] sm:$0xf]
    %v34 = vld [vmem:[%s1 + $0x2c] sm:$0xf]
    %v35 = vld [vmem:[%s1 + $0x30] sm:$0xf]
    %v36 = vld [vmem:[%s1 + $0x34] sm:$0xf]
    %v37 = vld [vmem:[%s1 + $0x38] sm:$0xf]
    %v38 = vld [vmem:[%s1 + $0x3c] sm:$0xf]
    %v39 = vld [vmem:[%s2] sm:$0x1]
    %v41 = vperm.slane %v39, 0
    %v59 = vunpack.c.l.b16 %v23
    %v60 = vunpack.c.l.b16 %v24
    %v61 = vunpack.c.l.b16 %v25
    %v62 = vunpack.c.l.b16 %v26
    %v63 = vunpack.c.l.b16 %v27
    %v64 = vunpack.c.l.b16 %v28
    %v65 = vunpack.c.l.b16 %v29
    %v66 = vunpack.c.l.b16 %v30
    %v67 = vunpack.c.l.b16 %v31
    %v68 = vunpack.c.l.b16 %v32
    %v69 = vunpack.c.l.b16 %v33
    %v70 = vunpack.c.l.b16 %v34
    %v71 = vunpack.c.l.b16 %v35
    %v72 = vunpack.c.l.b16 %v36
    %v73 = vunpack.c.l.b16 %v37
    %v74 = vunpack.c.l.b16 %v38
    %v75 = vpack.c.b16 %v60, %v59
    %v76 = vpack.c.b16 %v62, %v61
    %v77 = vpack.c.b16 %v64, %v63
    %v78 = vpack.c.b16 %v66, %v65
    %v79 = vpack.c.b16 %v68, %v67
    %v80 = vpack.c.b16 %v70, %v69
    %v81 = vpack.c.b16 %v72, %v71
    %v82 = vpack.c.b16 %v74, %v73
    %91 = vmatpush.bf16.msra.mxu0 %v82
    %92 = vmatpush.bf16.msra.mxu0 %v81
    %93 = vmatpush.bf16.msra.mxu0 %v80
    %94 = vmatpush.bf16.msra.mxu0 %v79
    %95 = vmatpush.bf16.msra.mxu0 %v78
    %96 = vmatpush.bf16.msra.mxu0 %v77
    %97 = vmatpush.bf16.msra.mxu0 %v76
    %98 = vmatpush.bf16.msra.mxu0 %v75
    %99 = vmatmul.bf16.gmra.mxu0 %v22
    %v100 = vpop.f32.mrf.mxu0
    %v101 = vadd.f32 %v41, %v100
    %v102 = vpop.f32.mrf.mxu0
    %103 = vdwg.mxu0
    %v104 = vmax.f32 %v101, 0.0
    %v105 = vpack.c.bf16 %v104, %v104
    %v106 = vld [vmem:[%s3] sm:$0xf]
    %v107 = vld [vmem:[%s3 + $0x4] sm:$0xf]
    %v108 = vld [vmem:[%s3 + $0x8] sm:$0xf]
    %v109 = vld [vmem:[%s3 + $0xc] sm:$0xf]
    %v110 = vld [vmem:[%s3 + $0x10] sm:$0xf]
    %v111 = vld [vmem:[%s3 + $0x14] sm:$0xf]
    %v112 = vld [vmem:[%s3 + $0x18] sm:$0xf]
    %v113 = vld [vmem:[%s3 + $0x1c] sm:$0xf]
    %v114 = vld [vmem:[%s3 + $0x20] sm:$0xf]
    %v115 = vld [vmem:[%s3 + $0x24] sm:$0xf]
    %v116 = vld [vmem:[%s3 + $0x28] sm:$0xf]
    %v117 = vld [vmem:[%s3 + $0x2c] sm:$0xf]
    %v118 = vld [vmem:[%s3 + $0x30] sm:$0xf]
    %v119 = vld [vmem:[%s3 + $0x34] sm:$0xf]
    %v120 = vld [vmem:[%s3 + $0x38] sm:$0xf]
    %v121 = vld [vmem:[%s3 + $0x3c] sm:$0xf]
    %v122 = vld [vmem:[%s4] sm:$0x1]
    %v124 = vperm.slane %v122, 0
    %v142 = vunpack.c.l.b16 %v106
    %v143 = vunpack.c.l.b16 %v107
    %v144 = vunpack.c.l.b16 %v108
    %v145 = vunpack.c.l.b16 %v109
    %v146 = vunpack.c.l.b16 %v110
    %v147 = vunpack.c.l.b16 %v111
    %v148 = vunpack.c.l.b16 %v112
    %v149 = vunpack.c.l.b16 %v113
    %v150 = vunpack.c.l.b16 %v114
    %v151 = vunpack.c.l.b16 %v115
    %v152 = vunpack.c.l.b16 %v116
    %v153 = vunpack.c.l.b16 %v117
    %v154 = vunpack.c.l.b16 %v118
    %v155 = vunpack.c.l.b16 %v119
    %v156 = vunpack.c.l.b16 %v120
    %v157 = vunpack.c.l.b16 %v121
    %v158 = vpack.c.b16 %v143, %v142
    %v159 = vpack.c.b16 %v145, %v144
    %v160 = vpack.c.b16 %v147, %v146
    %v161 = vpack.c.b16 %v149, %v148
    %v162 = vpack.c.b16 %v151, %v150
    %v163 = vpack.c.b16 %v153, %v152
    %v164 = vpack.c.b16 %v155, %v154
    %v165 = vpack.c.b16 %v157, %v156
    %174 = vmatpush.bf16.msra.mxu0 %v165
    %175 = vmatpush.bf16.msra.mxu0 %v164
    %176 = vmatpush.bf16.msra.mxu0 %v163
    %177 = vmatpush.bf16.msra.mxu0 %v162
    %178 = vmatpush.bf16.msra.mxu0 %v161
    %179 = vmatpush.bf16.msra.mxu0 %v160
    %180 = vmatpush.bf16.msra.mxu0 %v159
    %181 = vmatpush.bf16.msra.mxu0 %v158
    %182 = vmatmul.bf16.gmra.mxu0 %v105
    %v183 = vpop.f32.mrf.mxu0
    %v184 = vadd.f32 %v124, %v183
    %v185 = vpop.f32.mrf.mxu0
    %186 = vdwg.mxu0
    %v187 = vadd.f32 %v184, %v21
    %v188 = vmax.f32 %v187, 0.0
    %189 = vst [vmem:[#allocation2] sm:$0xff] %v188
    // Predicated region
    $region22: #{residual_block.1} parent=1 // pred_check
      _
    $region23: #{residual_block.1} parent=1 // pred_check_branch
      %191 = sbr.rel (0) target = $region25
    $region24: #{residual_block.1} parent=1 // pred_region
      %193 = vsyncadd [#allocation3], 0
      %s195 = sshll.u32 [#allocation2], 4
      %s196 = int_to_ptr.vmem [resolvable:$true] %s195
      %s197 = sshll.u32 %s5, 4
      %s198 = int_to_ptr.hbm [resolvable:$true] %s197
      %200 = dma.vmem_to_hbm [thread:$0]  %s196, 128, %s198, [#allocation3]
    $region25: #{residual_block.1} parent=1 // pred_fallthru
      _
    // Predicated region
    $region26: #{residual_block.1} parent=1 // pred_check
      _
    $region27: #{residual_block.1} parent=1 // pred_check_branch
      %202 = sbr.rel (0) target = $region29
    $region28: #{residual_block.1} parent=1 // pred_region
      %204 = dma.done [#allocation3], 128
    $region29: #{residual_block.1} parent=1 // pred_fallthru
      _
    %205 = vsyncpa [#allocation3], 1

</llo_original>
